<compile_context>
chip_gen: v6e
topology: v6e:2x2x1
jax: 0.10.0
libtpu: 0.0.40
codegen_flags: <defaults>
</compile_context>

<pallas_src>
import functools

import jax
import jax.numpy as jnp
from jax.experimental import pallas as pl
from jax.experimental.pallas import tpu as pltpu

NUM_BASIS = 10
DOMAIN_MIN = -1.0
DOMAIN_MAX = 1.0
WIDTH = (DOMAIN_MAX - DOMAIN_MIN) / (NUM_BASIS - 1) if NUM_BASIS > 1 else 1.0

SUBLANES = 16          # rows of the flattened-x view; dense for both f32 and bf16 tiles
MAX_TILE_M = 65536     # hard cap on lanes (columns) per grid step
MIN_PAR_TILE_M = 2048  # don't split into more blocks than this many columns each
MAX_PAR_BLOCKS = 8     # parallel-grid target for large inputs (feeds v7x's 2 TCs)


def bspline_kernel(x_ref, centers_ref, o_ref, *, dmin, dmax, inv_width, num_basis):
    # x_ref:       (SUBLANES, TILE_M) f32 VMEM   flattened-x tile (dense sublanes x lanes)
    # centers_ref: (num_basis,)       f32 SMEM   centers already divided by width
    # o_ref:       (num_basis, SUBLANES, TILE_M) basis-major output tile (lane-dense)
    xs = jnp.clip(x_ref[...], dmin, dmax) * inv_width   # prescale once per input element
    for b in range(num_basis):                           # small static unroll
        z = jnp.abs(xs - centers_ref[b])
        o_ref[b] = jnp.maximum(1.0 - z, 0.0).astype(o_ref.dtype)


def _vmem_capacity_bytes():
    try:
        return int(pltpu.get_tpu_info().vmem_capacity_bytes)
    except Exception:
        return 64 * 1024 * 1024   # conservative default (v7x per-core VMEM)


def _choose_tiling(n, num_basis, out_bytes):
    """Return (tile_m, n_blocks) for the (SUBLANES, n_cols) view of flattened x."""
    n_cols = pl.cdiv(max(n, 1), SUBLANES)
    n_cols = pl.cdiv(n_cols, 128) * 128

    # Per-column VMEM cost of one grid step: double-buffered input + output,
    # plus headroom for a few f32 tile-sized temporaries (register spill).
    per_col = (2 * SUBLANES * 4
               + 2 * num_basis * SUBLANES * out_bytes
               + 4 * SUBLANES * 4)
    budget = int(0.70 * _vmem_capacity_bytes())
    max_tile_m = max(128, min(MAX_TILE_M, (budget // per_col) // 128 * 128))

    blocks_fit = pl.cdiv(n_cols, max_tile_m)                      # needed to fit VMEM
    blocks_par = min(MAX_PAR_BLOCKS, n_cols // MIN_PAR_TILE_M)    # megacore target
    blocks = max(blocks_fit, blocks_par, 1)
    tile_m = pl.cdiv(pl.cdiv(n_cols, blocks), 128) * 128
    blocks = pl.cdiv(n_cols, tile_m)
    return tile_m, blocks


def _bspline_basis(x, centers, *, dmin=DOMAIN_MIN, dmax=DOMAIN_MAX, width=WIDTH,
                   out_dtype=jnp.bfloat16, basis_major=False):
    """B-spline (triangular) basis expansion.

    Default output axis order matches PyTorch: x.shape + (num_basis,).
    basis_major=True returns (num_basis,) + x.shape and skips the transpose.
    """
    orig_shape = x.shape
    num_basis = int(centers.shape[0])
    out_bytes = jnp.dtype(out_dtype).itemsize
    inv_width = 1.0 / float(width)

    x_flat = x.reshape(-1).astype(jnp.float32)
    n = x_flat.shape[0]
    tile_m, blocks = _choose_tiling(n, num_basis, out_bytes)
    w = blocks * tile_m
    n_pad = SUBLANES * w
    if n_pad != n:
        x_flat = jnp.pad(x_flat, (0, n_pad - n))
    x2 = x_flat.reshape(SUBLANES, w)

    centers_scaled = centers.reshape(-1).astype(jnp.float32) * jnp.float32(inv_width)

    kernel = functools.partial(bspline_kernel, dmin=float(dmin), dmax=float(dmax),
                               inv_width=inv_width, num_basis=num_basis)

    # Double-buffered input + output, spill headroom, centers/misc margin.
    working = (2 * SUBLANES * tile_m * 4
               + 2 * num_basis * SUBLANES * tile_m * out_bytes
               + 4 * SUBLANES * tile_m * 4
               + (1 << 20))
    vmem_limit = int(min(max(working + (4 << 20), 32 << 20), _vmem_capacity_bytes()))

    out3 = pl.pallas_call(
        kernel,
        out_shape=jax.ShapeDtypeStruct((num_basis, SUBLANES, w), out_dtype),
        grid_spec=pltpu.PrefetchScalarGridSpec(
            num_scalar_prefetch=0,
            grid=(blocks,),
            in_specs=[
                pl.BlockSpec((SUBLANES, tile_m), lambda i: (0, i)),
                pl.BlockSpec(memory_space=pltpu.MemorySpace.SMEM),
            ],
            out_specs=pl.BlockSpec((num_basis, SUBLANES, tile_m),
                                   lambda i: (0, 0, i)),
        ),
        compiler_params=pltpu.CompilerParams(
            dimension_semantics=("parallel",),
            vmem_limit_bytes=vmem_limit,
        ),
    )(x2, centers_scaled)

    out_bm = out3.reshape(num_basis, n_pad)   # free: contiguous row-major collapse
    if basis_major:
        if n_pad != n:
            out_bm = out_bm[:, :n]
        return out_bm.reshape((num_basis,) + orig_shape)
    # PyTorch layout: basis axis last.  Transpose runs on out_dtype (bf16 default).
    out = out_bm.T
    if n_pad != n:
        out = out[:n]
    return out.reshape(orig_shape + (num_basis,))


bspline_basis = jax.jit(
    _bspline_basis,
    static_argnames=("dmin", "dmax", "width", "out_dtype", "basis_major"),
)


if __name__ == "__main__":
    # Deterministic parameters (mirrors nn.Parameter init in __init__).
    centers = jnp.linspace(DOMAIN_MIN, DOMAIN_MAX, NUM_BASIS, dtype=jnp.float32)

    key = jax.random.PRNGKey(0)
    x = jax.random.uniform(
        key, (2, 4, 16, 16), dtype=jnp.float32, minval=-1.5, maxval=1.5
    )

    # Reference in plain JAX (same math as the PyTorch forward), f32.
    x_c = jnp.clip(x, DOMAIN_MIN, DOMAIN_MAX)[..., None]
    ref = jnp.maximum(1.0 - jnp.abs((x_c - centers[None, :]) / WIDTH), 0.0)

    # Default fast path: bf16 output, PyTorch axis order (basis last).
    out_bf16 = jax.block_until_ready(bspline_basis(x, centers))
    assert out_bf16.shape == x.shape + (NUM_BASIS,)
    assert out_bf16.dtype == jnp.bfloat16
    assert jnp.allclose(out_bf16.astype(jnp.float32), ref, atol=6e-3), "bf16 mismatch"

    # Exact f32 path (matches PyTorch numerics), basis-major layout (no transpose).
    out_f32_bm = jax.block_until_ready(
        bspline_basis(x, centers, out_dtype=jnp.float32, basis_major=True)
    )
    assert out_f32_bm.shape == (NUM_BASIS,) + x.shape
    assert out_f32_bm.dtype == jnp.float32
    ref_bm = jnp.moveaxis(ref, -1, 0)
    assert jnp.allclose(out_f32_bm, ref_bm, atol=3e-6), "f32 mismatch"

    print("KERNEL_OK")
</pallas_src>

<mosaic_0001>
module attributes {stable_mosaic.version = 11 : i64} {
  func.func @bspline_kernel(%arg0: i32, %arg1: memref<16x128xf32, #tpu.memory_space<vmem>>, %arg2: memref<10xf32, #tpu.memory_space<smem>>, %arg3: memref<10x16x128xbf16, #tpu.memory_space<vmem>>) attributes {dimension_semantics = [#tpu.dimension_semantics<parallel>], iteration_bounds = array<i64: 1>, scalar_prefetch = 0 : i64, scratch_operands = 0 : i64, tpu.core_type = #tpu.core_type<tc>, window_params = [{transform_indices = @transform_0, window_bounds = array<i64: 16, 128>}, {transform_indices = @transform_1, window_bounds = array<i64: 10>}, {transform_indices = @transform_2, window_bounds = array<i64: 10, 16, 128>}]} {
    %c0 = arith.constant 0 : index
    %c0_0 = arith.constant 0 : index
    %0 = vector.load %arg1[%c0, %c0_0] : memref<16x128xf32, #tpu.memory_space<vmem>>, vector<16x128xf32>
    %cst = arith.constant -1.000000e+00 : f32
    %cst_1 = arith.constant 1.000000e+00 : f32
    %1 = vector.broadcast %cst : f32 to vector<16x128xf32>
    %2 = arith.maximumf %1, %0 : vector<16x128xf32>
    %3 = vector.broadcast %cst_1 : f32 to vector<16x128xf32>
    %4 = arith.minimumf %3, %2 : vector<16x128xf32>
    %cst_2 = arith.constant 4.500000e+00 : f32
    %5 = vector.broadcast %cst_2 : f32 to vector<16x128xf32>
    %6 = arith.mulf %4, %5 : vector<16x128xf32>
    %c0_3 = arith.constant 0 : index
    %7 = memref.load %arg2[%c0_3] : memref<10xf32, #tpu.memory_space<smem>>
    %8 = vector.broadcast %7 : f32 to vector<16x128xf32>
    %9 = arith.subf %6, %8 : vector<16x128xf32>
    %10 = math.absf %9 : vector<16x128xf32>
    %cst_4 = arith.constant 1.000000e+00 : f32
    %11 = vector.broadcast %cst_4 : f32 to vector<16x128xf32>
    %12 = arith.subf %11, %10 : vector<16x128xf32>
    %cst_5 = arith.constant 0.000000e+00 : f32
    %13 = vector.broadcast %cst_5 : f32 to vector<16x128xf32>
    %14 = arith.maximumf %12, %13 : vector<16x128xf32>
    %15 = arith.truncf %14 : vector<16x128xf32> to vector<16x128xbf16>
    %c0_6 = arith.constant 0 : index
    %c0_7 = arith.constant 0 : index
    %c0_8 = arith.constant 0 : index
    %16 = vector.load %arg3[%c0_6, %c0_7, %c0_8] : memref<10x16x128xbf16, #tpu.memory_space<vmem>>, vector<1x16x128xbf16>
    %17 = vector.shape_cast %16 : vector<1x16x128xbf16> to vector<16x128xbf16>
    %18 = vector.shape_cast %15 : vector<16x128xbf16> to vector<1x16x128xbf16>
    tpu.vector_store %arg3[%c0_6, %c0_7, %c0_8], %18 {strides = array<i32>} : memref<10x16x128xbf16, #tpu.memory_space<vmem>>, vector<1x16x128xbf16>,
    %c1 = arith.constant 1 : index
    %19 = memref.load %arg2[%c1] : memref<10xf32, #tpu.memory_space<smem>>
    %20 = vector.broadcast %19 : f32 to vector<16x128xf32>
    %21 = arith.subf %6, %20 : vector<16x128xf32>
    %22 = math.absf %21 : vector<16x128xf32>
    %cst_9 = arith.constant 1.000000e+00 : f32
    %23 = vector.broadcast %cst_9 : f32 to vector<16x128xf32>
    %24 = arith.subf %23, %22 : vector<16x128xf32>
    %cst_10 = arith.constant 0.000000e+00 : f32
    %25 = vector.broadcast %cst_10 : f32 to vector<16x128xf32>
    %26 = arith.maximumf %24, %25 : vector<16x128xf32>
    %27 = arith.truncf %26 : vector<16x128xf32> to vector<16x128xbf16>
    %c1_11 = arith.constant 1 : index
    %c0_12 = arith.constant 0 : index
    %c0_13 = arith.constant 0 : index
    %28 = vector.load %arg3[%c1_11, %c0_12, %c0_13] : memref<10x16x128xbf16, #tpu.memory_space<vmem>>, vector<1x16x128xbf16>
    %29 = vector.shape_cast %28 : vector<1x16x128xbf16> to vector<16x128xbf16>
    %30 = vector.shape_cast %27 : vector<16x128xbf16> to vector<1x16x128xbf16>
    tpu.vector_store %arg3[%c1_11, %c0_12, %c0_13], %30 {strides = array<i32>} : memref<10x16x128xbf16, #tpu.memory_space<vmem>>, vector<1x16x128xbf16>,
    %c2 = arith.constant 2 : index
    %31 = memref.load %arg2[%c2] : memref<10xf32, #tpu.memory_space<smem>>
    %32 = vector.broadcast %31 : f32 to vector<16x128xf32>
    %33 = arith.subf %6, %32 : vector<16x128xf32>
    %34 = math.absf %33 : vector<16x128xf32>
    %cst_14 = arith.constant 1.000000e+00 : f32
    %35 = vector.broadcast %cst_14 : f32 to vector<16x128xf32>
    %36 = arith.subf %35, %34 : vector<16x128xf32>
    %cst_15 = arith.constant 0.000000e+00 : f32
    %37 = vector.broadcast %cst_15 : f32 to vector<16x128xf32>
    %38 = arith.maximumf %36, %37 : vector<16x128xf32>
    %39 = arith.truncf %38 : vector<16x128xf32> to vector<16x128xbf16>
    %c2_16 = arith.constant 2 : index
    %c0_17 = arith.constant 0 : index
    %c0_18 = arith.constant 0 : index
    %40 = vector.load %arg3[%c2_16, %c0_17, %c0_18] : memref<10x16x128xbf16, #tpu.memory_space<vmem>>, vector<1x16x128xbf16>
    %41 = vector.shape_cast %40 : vector<1x16x128xbf16> to vector<16x128xbf16>
    %42 = vector.shape_cast %39 : vector<16x128xbf16> to vector<1x16x128xbf16>
    tpu.vector_store %arg3[%c2_16, %c0_17, %c0_18], %42 {strides = array<i32>} : memref<10x16x128xbf16, #tpu.memory_space<vmem>>, vector<1x16x128xbf16>,
    %c3 = arith.constant 3 : index
    %43 = memref.load %arg2[%c3] : memref<10xf32, #tpu.memory_space<smem>>
    %44 = vector.broadcast %43 : f32 to vector<16x128xf32>
    %45 = arith.subf %6, %44 : vector<16x128xf32>
    %46 = math.absf %45 : vector<16x128xf32>
    %cst_19 = arith.constant 1.000000e+00 : f32
    %47 = vector.broadcast %cst_19 : f32 to vector<16x128xf32>
    %48 = arith.subf %47, %46 : vector<16x128xf32>
    %cst_20 = arith.constant 0.000000e+00 : f32
    %49 = vector.broadcast %cst_20 : f32 to vector<16x128xf32>
    %50 = arith.maximumf %48, %49 : vector<16x128xf32>
    %51 = arith.truncf %50 : vector<16x128xf32> to vector<16x128xbf16>
    %c3_21 = arith.constant 3 : index
    %c0_22 = arith.constant 0 : index
    %c0_23 = arith.constant 0 : index
    %52 = vector.load %arg3[%c3_21, %c0_22, %c0_23] : memref<10x16x128xbf16, #tpu.memory_space<vmem>>, vector<1x16x128xbf16>
    %53 = vector.shape_cast %52 : vector<1x16x128xbf16> to vector<16x128xbf16>
    %54 = vector.shape_cast %51 : vector<16x128xbf16> to vector<1x16x128xbf16>
    tpu.vector_store %arg3[%c3_21, %c0_22, %c0_23], %54 {strides = array<i32>} : memref<10x16x128xbf16, #tpu.memory_space<vmem>>, vector<1x16x128xbf16>,
    %c4 = arith.constant 4 : index
    %55 = memref.load %arg2[%c4] : memref<10xf32, #tpu.memory_space<smem>>
    %56 = vector.broadcast %55 : f32 to vector<16x128xf32>
    %57 = arith.subf %6, %56 : vector<16x128xf32>
    %58 = math.absf %57 : vector<16x128xf32>
    %cst_24 = arith.constant 1.000000e+00 : f32
    %59 = vector.broadcast %cst_24 : f32 to vector<16x128xf32>
    %60 = arith.subf %59, %58 : vector<16x128xf32>
    %cst_25 = arith.constant 0.000000e+00 : f32
    %61 = vector.broadcast %cst_25 : f32 to vector<16x128xf32>
    %62 = arith.maximumf %60, %61 : vector<16x128xf32>
    %63 = arith.truncf %62 : vector<16x128xf32> to vector<16x128xbf16>
    %c4_26 = arith.constant 4 : index
    %c0_27 = arith.constant 0 : index
    %c0_28 = arith.constant 0 : index
    %64 = vector.load %arg3[%c4_26, %c0_27, %c0_28] : memref<10x16x128xbf16, #tpu.memory_space<vmem>>, vector<1x16x128xbf16>
    %65 = vector.shape_cast %64 : vector<1x16x128xbf16> to vector<16x128xbf16>
    %66 = vector.shape_cast %63 : vector<16x128xbf16> to vector<1x16x128xbf16>
    tpu.vector_store %arg3[%c4_26, %c0_27, %c0_28], %66 {strides = array<i32>} : memref<10x16x128xbf16, #tpu.memory_space<vmem>>, vector<1x16x128xbf16>,
    %c5 = arith.constant 5 : index
    %67 = memref.load %arg2[%c5] : memref<10xf32, #tpu.memory_space<smem>>
    %68 = vector.broadcast %67 : f32 to vector<16x128xf32>
    %69 = arith.subf %6, %68 : vector<16x128xf32>
    %70 = math.absf %69 : vector<16x128xf32>
    %cst_29 = arith.constant 1.000000e+00 : f32
    %71 = vector.broadcast %cst_29 : f32 to vector<16x128xf32>
    %72 = arith.subf %71, %70 : vector<16x128xf32>
    %cst_30 = arith.constant 0.000000e+00 : f32
    %73 = vector.broadcast %cst_30 : f32 to vector<16x128xf32>
    %74 = arith.maximumf %72, %73 : vector<16x128xf32>
    %75 = arith.truncf %74 : vector<16x128xf32> to vector<16x128xbf16>
    %c5_31 = arith.constant 5 : index
    %c0_32 = arith.constant 0 : index
    %c0_33 = arith.constant 0 : index
    %76 = vector.load %arg3[%c5_31, %c0_32, %c0_33] : memref<10x16x128xbf16, #tpu.memory_space<vmem>>, vector<1x16x128xbf16>
    %77 = vector.shape_cast %76 : vector<1x16x128xbf16> to vector<16x128xbf16>
    %78 = vector.shape_cast %75 : vector<16x128xbf16> to vector<1x16x128xbf16>
    tpu.vector_store %arg3[%c5_31, %c0_32, %c0_33], %78 {strides = array<i32>} : memref<10x16x128xbf16, #tpu.memory_space<vmem>>, vector<1x16x128xbf16>,
    %c6 = arith.constant 6 : index
    %79 = memref.load %arg2[%c6] : memref<10xf32, #tpu.memory_space<smem>>
    %80 = vector.broadcast %79 : f32 to vector<16x128xf32>
    %81 = arith.subf %6, %80 : vector<16x128xf32>
    %82 = math.absf %81 : vector<16x128xf32>
    %cst_34 = arith.constant 1.000000e+00 : f32
    %83 = vector.broadcast %cst_34 : f32 to vector<16x128xf32>
    %84 = arith.subf %83, %82 : vector<16x128xf32>
    %cst_35 = arith.constant 0.000000e+00 : f32
    %85 = vector.broadcast %cst_35 : f32 to vector<16x128xf32>
    %86 = arith.maximumf %84, %85 : vector<16x128xf32>
    %87 = arith.truncf %86 : vector<16x128xf32> to vector<16x128xbf16>
    %c6_36 = arith.constant 6 : index
    %c0_37 = arith.constant 0 : index
    %c0_38 = arith.constant 0 : index
    %88 = vector.load %arg3[%c6_36, %c0_37, %c0_38] : memref<10x16x128xbf16, #tpu.memory_space<vmem>>, vector<1x16x128xbf16>
    %89 = vector.shape_cast %88 : vector<1x16x128xbf16> to vector<16x128xbf16>
    %90 = vector.shape_cast %87 : vector<16x128xbf16> to vector<1x16x128xbf16>
    tpu.vector_store %arg3[%c6_36, %c0_37, %c0_38], %90 {strides = array<i32>} : memref<10x16x128xbf16, #tpu.memory_space<vmem>>, vector<1x16x128xbf16>,
    %c7 = arith.constant 7 : index
    %91 = memref.load %arg2[%c7] : memref<10xf32, #tpu.memory_space<smem>>
    %92 = vector.broadcast %91 : f32 to vector<16x128xf32>
    %93 = arith.subf %6, %92 : vector<16x128xf32>
    %94 = math.absf %93 : vector<16x128xf32>
    %cst_39 = arith.constant 1.000000e+00 : f32
    %95 = vector.broadcast %cst_39 : f32 to vector<16x128xf32>
    %96 = arith.subf %95, %94 : vector<16x128xf32>
    %cst_40 = arith.constant 0.000000e+00 : f32
    %97 = vector.broadcast %cst_40 : f32 to vector<16x128xf32>
    %98 = arith.maximumf %96, %97 : vector<16x128xf32>
    %99 = arith.truncf %98 : vector<16x128xf32> to vector<16x128xbf16>
    %c7_41 = arith.constant 7 : index
    %c0_42 = arith.constant 0 : index
    %c0_43 = arith.constant 0 : index
    %100 = vector.load %arg3[%c7_41, %c0_42, %c0_43] : memref<10x16x128xbf16, #tpu.memory_space<vmem>>, vector<1x16x128xbf16>
    %101 = vector.shape_cast %100 : vector<1x16x128xbf16> to vector<16x128xbf16>
    %102 = vector.shape_cast %99 : vector<16x128xbf16> to vector<1x16x128xbf16>
    tpu.vector_store %arg3[%c7_41, %c0_42, %c0_43], %102 {strides = array<i32>} : memref<10x16x128xbf16, #tpu.memory_space<vmem>>, vector<1x16x128xbf16>,
    %c8 = arith.constant 8 : index
    %103 = memref.load %arg2[%c8] : memref<10xf32, #tpu.memory_space<smem>>
    %104 = vector.broadcast %103 : f32 to vector<16x128xf32>
    %105 = arith.subf %6, %104 : vector<16x128xf32>
    %106 = math.absf %105 : vector<16x128xf32>
    %cst_44 = arith.constant 1.000000e+00 : f32
    %107 = vector.broadcast %cst_44 : f32 to vector<16x128xf32>
    %108 = arith.subf %107, %106 : vector<16x128xf32>
    %cst_45 = arith.constant 0.000000e+00 : f32
    %109 = vector.broadcast %cst_45 : f32 to vector<16x128xf32>
    %110 = arith.maximumf %108, %109 : vector<16x128xf32>
    %111 = arith.truncf %110 : vector<16x128xf32> to vector<16x128xbf16>
    %c8_46 = arith.constant 8 : index
    %c0_47 = arith.constant 0 : index
    %c0_48 = arith.constant 0 : index
    %112 = vector.load %arg3[%c8_46, %c0_47, %c0_48] : memref<10x16x128xbf16, #tpu.memory_space<vmem>>, vector<1x16x128xbf16>
    %113 = vector.shape_cast %112 : vector<1x16x128xbf16> to vector<16x128xbf16>
    %114 = vector.shape_cast %111 : vector<16x128xbf16> to vector<1x16x128xbf16>
    tpu.vector_store %arg3[%c8_46, %c0_47, %c0_48], %114 {strides = array<i32>} : memref<10x16x128xbf16, #tpu.memory_space<vmem>>, vector<1x16x128xbf16>,
    %c9 = arith.constant 9 : index
    %115 = memref.load %arg2[%c9] : memref<10xf32, #tpu.memory_space<smem>>
    %116 = vector.broadcast %115 : f32 to vector<16x128xf32>
    %117 = arith.subf %6, %116 : vector<16x128xf32>
    %118 = math.absf %117 : vector<16x128xf32>
    %cst_49 = arith.constant 1.000000e+00 : f32
    %119 = vector.broadcast %cst_49 : f32 to vector<16x128xf32>
    %120 = arith.subf %119, %118 : vector<16x128xf32>
    %cst_50 = arith.constant 0.000000e+00 : f32
    %121 = vector.broadcast %cst_50 : f32 to vector<16x128xf32>
    %122 = arith.maximumf %120, %121 : vector<16x128xf32>
    %123 = arith.truncf %122 : vector<16x128xf32> to vector<16x128xbf16>
    %c9_51 = arith.constant 9 : index
    %c0_52 = arith.constant 0 : index
    %c0_53 = arith.constant 0 : index
    %124 = vector.load %arg3[%c9_51, %c0_52, %c0_53] : memref<10x16x128xbf16, #tpu.memory_space<vmem>>, vector<1x16x128xbf16>
    %125 = vector.shape_cast %124 : vector<1x16x128xbf16> to vector<16x128xbf16>
    %126 = vector.shape_cast %123 : vector<16x128xbf16> to vector<1x16x128xbf16>
    tpu.vector_store %arg3[%c9_51, %c0_52, %c0_53], %126 {strides = array<i32>} : memref<10x16x128xbf16, #tpu.memory_space<vmem>>, vector<1x16x128xbf16>,
    return
  }
  func.func @transform_0(%arg0: i32) -> (i32, i32) {
    %c0_i32 = arith.constant 0 : i32
    %c0_i32_0 = arith.constant 0 : i32
    return %c0_i32, %arg0 : i32, i32
  }
  func.func @transform_1(%arg0: i32) -> i32 {
    %c0_i32 = arith.constant 0 : i32
    %c0_i32_0 = arith.constant 0 : i32
    return %c0_i32 : i32
  }
  func.func @transform_2(%arg0: i32) -> (i32, i32, i32) {
    %c0_i32 = arith.constant 0 : i32
    %c0_i32_0 = arith.constant 0 : i32
    %c0_i32_1 = arith.constant 0 : i32
    return %c0_i32, %c0_i32_0, %arg0 : i32, i32, i32
  }
}

</mosaic_0001>

<llo_original>
// kernel: _bspline_basis.1
$region0: #{_bspline_basis.1}
  #allocation0 [shape = 'u32[]', space=smem, size = 0x4, offset = 0x4, fixed_abs, tag = 'smem constant byte address 0x4 - core index']
  #allocation1 [shape = 'u32[144,128]{1,0:T(1,128)}', space=vmem, size = 0x12000, scoped, tag = 'internal scratch']
  %s0 = inlined_call_operand.vmem [shape: f32[16,128], index: 0, kind: input, shape index: {}]
  %s1 = inlined_call_operand.vmem [shape: f32[10], index: 1, kind: input, shape index: {}]
  %s2 = inlined_call_operand.vmem [shape: bf16[10,16,128], index: 2, kind: output, shape index: {}]
  %s3 = sld [smem:[#allocation0]]
  $region22: #{_bspline_basis.1} parent=0
    _
  %s5 = ssub.s32 1, %s3
  %s6 = scalar_select 0, %s5, %s3
  $region1: #{_bspline_basis.1} parent=0
    #allocation2 [shape = 'u8[512]{0}', space=smem, size = 0x200, scoped, tag = 'input window, operand 1, single buffered']
    #allocation3 [shape = 's32[1]{0}', space=sflag, size = 0x4, scoped, tag = 'scoped memory for _bspline_basis.1']
    %7 = vsyncpa [#allocation3], 0
    // Predicated region
    $region2: #{_bspline_basis.1} parent=1 // pred_check
      _
    $region3: #{_bspline_basis.1} parent=1 // pred_check_branch
      %9 = sbr.rel (0) target = $region5
    $region4: #{_bspline_basis.1} parent=1 // pred_region
      _
    $region5: #{_bspline_basis.1} parent=1 // pred_fallthru
      _
    // Predicated region
    $region6: #{_bspline_basis.1} parent=1 // pred_check
      _
    $region7: #{_bspline_basis.1} parent=1 // pred_check_branch
      %11 = sbr.rel (0) target = $region9
    $region8: #{_bspline_basis.1} parent=1 // pred_region
      %s13 = ssub.s32 16, 16
      %14 = vsyncadd [#allocation3], %s13
      %s16 = sshll.u32 %s1, 4
      %s17 = int_to_ptr.vmem [resolvable:$true] %s16
      %19 = dma.vmem_to_smem %s17, 16, [#allocation2], [#allocation3]
    $region9: #{_bspline_basis.1} parent=1 // pred_fallthru
      _
    // Predicated region
    $region10: #{_bspline_basis.1} parent=1 // pred_check
      _
    $region11: #{_bspline_basis.1} parent=1 // pred_check_branch
      %21 = sbr.rel (0) target = $region13
    $region12: #{_bspline_basis.1} parent=1 // pred_region
      %22 = dma.done [#allocation3], 16
    $region13: #{_bspline_basis.1} parent=1 // pred_fallthru
      _
    %23 = sfence
    %v24 = vld [vmem:[%s0] sm:$0xff]
    %v25 = vld [vmem:[%s0 + $0x8] sm:$0xff]
    %v26 = vmax.f32 %v24, -1.0
    %v27 = vmax.f32 %v25, -1.0
    %v28 = vmin.f32 %v26, 1.0
    %v29 = vmin.f32 %v27, 1.0
    %v30 = vmul.f32 %v28, 4.5
    %v31 = vmul.f32 %v29, 4.5
    %s32 = sld [smem:[#allocation2]]
    %v33 = vstv %s32
    %v34 = vsub.f32 %v30, %v33
    %v35 = vsub.f32 %v31, %v33
    %v36 = vand.u32 2147483647, %v34
    %v37 = vand.u32 2147483647, %v35
    %v38 = vsub.f32 1.0, %v36
    %v39 = vsub.f32 1.0, %v37
    %v40 = vmax.f32 %v38, 0.0
    %v41 = vmax.f32 %v39, 0.0
    %v42 = vpack.c.bf16 %v41, %v40
    %v44 = vunpack.c.l.b16 %v42
    %v45 = vunpack.c.h.b16 %v42
    %v46 = vpack.c.b16 %v44, %v44
    %v47 = vpack.c.b16 %v45, %v45
    %50 = vst [vmem:[%s2] sm:$0xf] %v46
    %51 = vst [vmem:[%s2 + $0x4] sm:$0xf] %v47
    %s52 = sld [smem:[#allocation2 + $0x1]]
    %v53 = vstv %s52
    %v54 = vsub.f32 %v30, %v53
    %v55 = vsub.f32 %v31, %v53
    %v56 = vand.u32 2147483647, %v54
    %v57 = vand.u32 2147483647, %v55
    %v58 = vsub.f32 1.0, %v56
    %v59 = vsub.f32 1.0, %v57
    %v60 = vmax.f32 %v58, 0.0
    %v61 = vmax.f32 %v59, 0.0
    %v62 = vpack.c.bf16 %v61, %v60
    %v64 = vunpack.c.l.b16 %v62
    %v65 = vunpack.c.h.b16 %v62
    %v66 = vpack.c.b16 %v64, %v64
    %v67 = vpack.c.b16 %v65, %v65
    %s70 = scalar_lea.vmem %s2, 8
    %71 = vst [vmem:[%s70] sm:$0xf] %v66
    %72 = vst [vmem:[%s70 + $0x4] sm:$0xf] %v67
    %s73 = sld [smem:[#allocation2 + $0x2]]
    %v74 = vstv %s73
    %v75 = vsub.f32 %v30, %v74
    %v76 = vsub.f32 %v31, %v74
    %v77 = vand.u32 2147483647, %v75
    %v78 = vand.u32 2147483647, %v76
    %v79 = vsub.f32 1.0, %v77
    %v80 = vsub.f32 1.0, %v78
    %v81 = vmax.f32 %v79, 0.0
    %v82 = vmax.f32 %v80, 0.0
    %v83 = vpack.c.bf16 %v82, %v81
    %v85 = vunpack.c.l.b16 %v83
    %v86 = vunpack.c.h.b16 %v83
    %v87 = vpack.c.b16 %v85, %v85
    %v88 = vpack.c.b16 %v86, %v86
    %s91 = scalar_lea.vmem %s2, 16
    %92 = vst [vmem:[%s91] sm:$0xf] %v87
    %93 = vst [vmem:[%s91 + $0x4] sm:$0xf] %v88
    %s94 = sld [smem:[#allocation2 + $0x3]]
    %v95 = vstv %s94
    %v96 = vsub.f32 %v30, %v95
    %v97 = vsub.f32 %v31, %v95
    %v98 = vand.u32 2147483647, %v96
    %v99 = vand.u32 2147483647, %v97
    %v100 = vsub.f32 1.0, %v98
    %v101 = vsub.f32 1.0, %v99
    %v102 = vmax.f32 %v100, 0.0
    %v103 = vmax.f32 %v101, 0.0
    %v104 = vpack.c.bf16 %v103, %v102
    %v106 = vunpack.c.l.b16 %v104
    %v107 = vunpack.c.h.b16 %v104
    %v108 = vpack.c.b16 %v106, %v106
    %v109 = vpack.c.b16 %v107, %v107
    %s112 = scalar_lea.vmem %s2, 24
    %113 = vst [vmem:[%s112] sm:$0xf] %v108
    %114 = vst [vmem:[%s112 + $0x4] sm:$0xf] %v109
    %s115 = sld [smem:[#allocation2 + $0x4]]
    %v116 = vstv %s115
    %v117 = vsub.f32 %v30, %v116
    %v118 = vsub.f32 %v31, %v116
    %v119 = vand.u32 2147483647, %v117
    %v120 = vand.u32 2147483647, %v118
    %v121 = vsub.f32 1.0, %v119
    %v122 = vsub.f32 1.0, %v120
    %v123 = vmax.f32 %v121, 0.0
    %v124 = vmax.f32 %v122, 0.0
    %v125 = vpack.c.bf16 %v124, %v123
    %v127 = vunpack.c.l.b16 %v125
    %v128 = vunpack.c.h.b16 %v125
    %v129 = vpack.c.b16 %v127, %v127
    %v130 = vpack.c.b16 %v128, %v128
    %s133 = scalar_lea.vmem %s2, 32
    %134 = vst [vmem:[%s133] sm:$0xf] %v129
    %135 = vst [vmem:[%s133 + $0x4] sm:$0xf] %v130
    %s136 = sld [smem:[#allocation2 + $0x5]]
    %v137 = vstv %s136
    %v138 = vsub.f32 %v30, %v137
    %v139 = vsub.f32 %v31, %v137
    %v140 = vand.u32 2147483647, %v138
    %v141 = vand.u32 2147483647, %v139
    %v142 = vsub.f32 1.0, %v140
    %v143 = vsub.f32 1.0, %v141
    %v144 = vmax.f32 %v142, 0.0
    %v145 = vmax.f32 %v143, 0.0
    %v146 = vpack.c.bf16 %v145, %v144
    %v148 = vunpack.c.l.b16 %v146
    %v149 = vunpack.c.h.b16 %v146
    %v150 = vpack.c.b16 %v148, %v148
    %v151 = vpack.c.b16 %v149, %v149
    %s154 = scalar_lea.vmem %s2, 40
    %155 = vst [vmem:[%s154] sm:$0xf] %v150
    %156 = vst [vmem:[%s154 + $0x4] sm:$0xf] %v151
    %s157 = sld [smem:[#allocation2 + $0x6]]
    %v158 = vstv %s157
    %v159 = vsub.f32 %v30, %v158
    %v160 = vsub.f32 %v31, %v158
    %v161 = vand.u32 2147483647, %v159
    %v162 = vand.u32 2147483647, %v160
    %v163 = vsub.f32 1.0, %v161
    %v164 = vsub.f32 1.0, %v162
    %v165 = vmax.f32 %v163, 0.0
    %v166 = vmax.f32 %v164, 0.0
    %v167 = vpack.c.bf16 %v166, %v165
    %v169 = vunpack.c.l.b16 %v167
    %v170 = vunpack.c.h.b16 %v167
    %v171 = vpack.c.b16 %v169, %v169
    %v172 = vpack.c.b16 %v170, %v170
    %s175 = scalar_lea.vmem %s2, 48
    %176 = vst [vmem:[%s175] sm:$0xf] %v171
    %177 = vst [vmem:[%s175 + $0x4] sm:$0xf] %v172
    %s178 = sld [smem:[#allocation2 + $0x7]]
    %v179 = vstv %s178
    %v180 = vsub.f32 %v30, %v179
    %v181 = vsub.f32 %v31, %v179
    %v182 = vand.u32 2147483647, %v180
    %v183 = vand.u32 2147483647, %v181
    %v184 = vsub.f32 1.0, %v182
    %v185 = vsub.f32 1.0, %v183
    %v186 = vmax.f32 %v184, 0.0
    %v187 = vmax.f32 %v185, 0.0
    %v188 = vpack.c.bf16 %v187, %v186
    %v190 = vunpack.c.l.b16 %v188
    %v191 = vunpack.c.h.b16 %v188
    %v192 = vpack.c.b16 %v190, %v190
    %v193 = vpack.c.b16 %v191, %v191
    %s196 = scalar_lea.vmem %s2, 56
    %197 = vst [vmem:[%s196] sm:$0xf] %v192
    %198 = vst [vmem:[%s196 + $0x4] sm:$0xf] %v193
    %s199 = sld [smem:[#allocation2 + $0x8]]
    %v200 = vstv %s199
    %v201 = vsub.f32 %v30, %v200
    %v202 = vsub.f32 %v31, %v200
    %v203 = vand.u32 2147483647, %v201
    %v204 = vand.u32 2147483647, %v202
    %v205 = vsub.f32 1.0, %v203
    %v206 = vsub.f32 1.0, %v204
    %v207 = vmax.f32 %v205, 0.0
    %v208 = vmax.f32 %v206, 0.0
    %v209 = vpack.c.bf16 %v208, %v207
    %v211 = vunpack.c.l.b16 %v209
    %v212 = vunpack.c.h.b16 %v209
    %v213 = vpack.c.b16 %v211, %v211
    %v214 = vpack.c.b16 %v212, %v212
    %s217 = scalar_lea.vmem %s2, 64
    %218 = vst [vmem:[%s217] sm:$0xf] %v213
    %219 = vst [vmem:[%s217 + $0x4] sm:$0xf] %v214
    %s220 = sld [smem:[#allocation2 + $0x9]]
    %v221 = vstv %s220
    %v222 = vsub.f32 %v30, %v221
    %v223 = vsub.f32 %v31, %v221
    %v224 = vand.u32 2147483647, %v222
    %v225 = vand.u32 2147483647, %v223
    %v226 = vsub.f32 1.0, %v224
    %v227 = vsub.f32 1.0, %v225
    %v228 = vmax.f32 %v226, 0.0
    %v229 = vmax.f32 %v227, 0.0
    %v230 = vpack.c.bf16 %v229, %v228
    %v232 = vunpack.c.l.b16 %v230
    %v233 = vunpack.c.h.b16 %v230
    %v234 = vpack.c.b16 %v232, %v232
    %v235 = vpack.c.b16 %v233, %v233
    %s238 = scalar_lea.vmem %s2, 72
    %239 = vst [vmem:[%s238] sm:$0xf] %v234
    %240 = vst [vmem:[%s238 + $0x4] sm:$0xf] %v235
    // Predicated region
    $region14: #{_bspline_basis.1} parent=1 // pred_check
      _
    $region15: #{_bspline_basis.1} parent=1 // pred_check_branch
      %242 = sbr.rel (0) target = $region17
    $region16: #{_bspline_basis.1} parent=1 // pred_region
      _
    $region17: #{_bspline_basis.1} parent=1 // pred_fallthru
      _
    // Predicated region
    $region18: #{_bspline_basis.1} parent=1 // pred_check
      _
    $region19: #{_bspline_basis.1} parent=1 // pred_check_branch
      %244 = sbr.rel (0) target = $region21
    $region20: #{_bspline_basis.1} parent=1 // pred_region
      _
    $region21: #{_bspline_basis.1} parent=1 // pred_fallthru
      _
    %245 = vsyncpa [#allocation3], 1

</llo_original>
